<compile_context>
chip_gen: v7x
topology: tpu7x:2x2x1
jax: 0.10.0
libtpu: 0.0.40
codegen_flags: <defaults>
</compile_context>

<pallas_src>
import functools

import jax
import jax.numpy as jnp
from jax.experimental import pallas as pl
from jax.experimental.pallas import tpu as pltpu

LANES = 128                      # lane width (fast axis)
SUBLANES = 8                     # f32 sublane tile
BLOCK_ROWS_MAX = 8192            # 8192 x 128 x 4B = 4 MiB f32 per block
VMEM_LIMIT_BYTES = 32 * 1024 * 1024


def _restrict_loss_kernel(x_ref, o_ref, *, rows, block_rows, steps, grid_n,
                          needs_mask):
    """Accumulate per-lane partial sums of (x - clip(x, 0, 1))**2.

    o_ref is an (8, 128) f32 block that stays resident across the reduction
    ("arbitrary") grid axis; each "parallel" part owns its own block.
    """
    p = pl.program_id(0)   # part (TensorCore split)
    i = pl.program_id(1)   # reduction step within the part

    @pl.when(i == 0)
    def _():
        o_ref[...] = jnp.zeros_like(o_ref)

    x = x_ref[...].astype(jnp.float32)
    # (relu(x-1) + relu(-x))**2 == (x - clip(x, 0, 1))**2   (4 VALU ops/elem)
    d = x - jnp.clip(x, 0.0, 1.0)
    sq = d * d

    def fold_add(v):
        # (block_rows, 128) -> (8, 128): tile-aligned reshape + pure VPU adds.
        o_ref[...] += v.reshape(-1, SUBLANES, LANES).sum(axis=0)

    if needs_mask:
        blk = p * steps + i     # logical block index (may overhang the array)

        @pl.when(blk >= grid_n - 1)
        def _():
            # Edge block(s) only: mask rows past the true end of the array.
            # jnp.where (not an arithmetic mask) so OOB garbage/NaN never
            # propagates.
            row0 = blk * block_rows
            row_ids = row0 + jax.lax.broadcasted_iota(jnp.int32, sq.shape, 0)
            fold_add(jnp.where(row_ids < rows, sq, 0.0))

        @pl.when(blk < grid_n - 1)
        def _():
            fold_add(sq)
    else:
        fold_add(sq)


def restrict_loss(x, *, block_rows_max=BLOCK_ROWS_MAX):
    """Pallas implementation of Restrict_Loss.forward. Returns a scalar f32."""
    n_true = x.size
    flat = jnp.ravel(x)  # free reshape, native dtype (cast happens in-kernel)

    # Bulk region aligned to the dtype's native sublane packing
    # (8*128 elems for f32, 16*128 for bf16, ...): lane-dense (rows, 128)
    # view, pure reshape, no pad / no extra HBM pass.  Tail is plain jnp.
    packing = max(1, 4 // x.dtype.itemsize)
    row_tile = SUBLANES * packing
    chunk = row_tile * LANES
    n_main = (n_true // chunk) * chunk
    rows = n_main // LANES

    if n_main < n_true:
        t = flat[n_main:].astype(jnp.float32)
        td = t - jnp.clip(t, 0.0, 1.0)
        tail_sum = jnp.sum(td * td)
    else:
        tail_sum = jnp.float32(0.0)

    if rows == 0:
        # Input smaller than one aligned chunk: nothing for the kernel to do.
        return (tail_sum / n_true).astype(jnp.float32)

    main = flat if n_main == n_true else flat[:n_main]
    x2d = main.reshape(rows, LANES)

    block_rows = min(block_rows_max, rows)
    block_rows = max(row_tile, (block_rows // row_tile) * row_tile)
    grid_n = pl.cdiv(rows, block_rows)

    # Unconditional 2-way TensorCore split whenever there is >1 block; the
    # gated row mask + clamped index_map absorb any overhang.  On 1-TC chips
    # (v5e/v6e) the extra leading axis just runs serially — harmless.
    if grid_n >= 2:
        parts, steps = 2, pl.cdiv(grid_n, 2)
    else:
        parts, steps = 1, 1
    needs_mask = parts * steps * block_rows != rows

    kernel = functools.partial(
        _restrict_loss_kernel,
        rows=rows, block_rows=block_rows, steps=steps, grid_n=grid_n,
        needs_mask=needs_mask)

    # Clamp the block index so duplicated overhang blocks never DMA OOB;
    # their (re-read) contribution is zeroed by the in-kernel row mask.
    in_map = lambda p, i: (jnp.minimum(p * steps + i, grid_n - 1), 0)

    partial_sums = pl.pallas_call(
        kernel,
        out_shape=jax.ShapeDtypeStruct((parts * SUBLANES, LANES), jnp.float32),
        grid_spec=pltpu.PrefetchScalarGridSpec(
            num_scalar_prefetch=0,
            grid=(parts, steps),
            in_specs=[pl.BlockSpec((block_rows, LANES), in_map)],
            out_specs=pl.BlockSpec((SUBLANES, LANES), lambda p, i: (p, 0)),
        ),
        compiler_params=pltpu.CompilerParams(
            dimension_semantics=("parallel", "arbitrary"),
            vmem_limit_bytes=VMEM_LIMIT_BYTES),
        cost_estimate=pl.CostEstimate(
            flops=5 * n_main,
            transcendentals=0,
            bytes_accessed=n_main * x.dtype.itemsize
            + parts * SUBLANES * LANES * 4),
    )(x2d)

    total = jnp.sum(partial_sums) + tail_sum
    return (total / n_true).astype(jnp.float32)


def restrict_loss_ref(x):
    """Pure-JAX reference (mirrors the PyTorch module)."""
    x = x.astype(jnp.float32)
    err = jnp.maximum(x - 1.0, 0.0) + jnp.maximum(-x, 0.0)
    return jnp.mean(err * err)


if __name__ == "__main__":
    key = jax.random.PRNGKey(0)
    k1, k2, k3, k4 = jax.random.split(key, 4)

    # 1) Primary test: small NCHW input, values outside [0, 1], single block.
    x1 = jax.random.normal(k1, (2, 4, 16, 16), dtype=jnp.float32) * 2.0
    out1 = jax.block_until_ready(restrict_loss(x1))
    ref1 = jax.block_until_ready(restrict_loss_ref(x1))
    assert jnp.allclose(out1, ref1, rtol=2e-5, atol=1e-6), (out1, ref1)

    # 2) Size not a multiple of the block (small block override): exercises
    #    the gated row mask, the odd-grid duplicate block (clamped index_map),
    #    the 2-part split and the jnp tail path.
    x2 = jax.random.normal(k2, (2, 4, 130, 130), dtype=jnp.float32) * 2.0
    out2 = jax.block_until_ready(restrict_loss(x2, block_rows_max=128))
    ref2 = jax.block_until_ready(restrict_loss_ref(x2))
    assert jnp.allclose(out2, ref2, rtol=2e-5, atol=1e-6), (out2, ref2)

    # 3) Multi-block at the default (4 MiB) block size: 2-part split, no mask.
    x3 = jax.random.normal(k3, (4, 8, 256, 256), dtype=jnp.float32) * 2.0
    out3 = jax.block_until_ready(restrict_loss(x3))
    ref3 = jax.block_until_ready(restrict_loss_ref(x3))
    assert jnp.allclose(out3, ref3, rtol=2e-5, atol=1e-6), (out3, ref3)

    # 4) bf16 input: 16*128-aligned chunk split, in-kernel f32 cast.
    x4 = (jax.random.normal(k4, (2, 4, 16, 16), dtype=jnp.float32) * 2.0
          ).astype(jnp.bfloat16)
    out4 = jax.block_until_ready(restrict_loss(x4))
    ref4 = jax.block_until_ready(restrict_loss_ref(x4))
    assert jnp.allclose(out4, ref4, rtol=2e-5, atol=1e-6), (out4, ref4)

    print("KERNEL_OK")
</pallas_src>

<mosaic_0001>
module attributes {stable_mosaic.version = 11 : i64} {
  func.func @_restrict_loss_kernel(%arg0: i32, %arg1: i32, %arg2: memref<16x128xf32, #tpu.memory_space<vmem>>, %arg3: memref<8x128xf32, #tpu.memory_space<vmem>>) attributes {dimension_semantics = [#tpu.dimension_semantics<parallel>, #tpu.dimension_semantics<arbitrary>], iteration_bounds = array<i64: 1, 1>, scalar_prefetch = 0 : i64, scratch_operands = 0 : i64, tpu.core_type = #tpu.core_type<tc>, window_params = [{transform_indices = @transform_0, window_bounds = array<i64: 16, 128>}, {transform_indices = @transform_1, window_bounds = array<i64: 8, 128>}]} {
    %c0_i32 = arith.constant 0 : i32
    %0 = arith.cmpi eq, %arg1, %c0_i32 : i32
    %1 = arith.extui %0 : i1 to i32
    %c0_i32_0 = arith.constant 0 : i32
    %2 = arith.cmpi ne, %1, %c0_i32_0 : i32
    scf.if %2 {
      %cst_8 = arith.constant 0.000000e+00 : f32
      %15 = vector.broadcast %cst_8 : f32 to vector<8x128xf32>
      %c0_9 = arith.constant 0 : index
      %c0_10 = arith.constant 0 : index
      %16 = vector.load %arg3[%c0_9, %c0_10] : memref<8x128xf32, #tpu.memory_space<vmem>>, vector<8x128xf32>
      tpu.vector_store %arg3[%c0_9, %c0_10], %15 {strides = array<i32>} : memref<8x128xf32, #tpu.memory_space<vmem>>, vector<8x128xf32>,
    } else {
    }
    %c0 = arith.constant 0 : index
    %c0_1 = arith.constant 0 : index
    %3 = vector.load %arg2[%c0, %c0_1] : memref<16x128xf32, #tpu.memory_space<vmem>>, vector<16x128xf32>
    %cst = arith.constant 0.000000e+00 : f32
    %cst_2 = arith.constant 1.000000e+00 : f32
    %4 = vector.broadcast %cst : f32 to vector<16x128xf32>
    %5 = arith.maximumf %4, %3 : vector<16x128xf32>
    %6 = vector.broadcast %cst_2 : f32 to vector<16x128xf32>
    %7 = arith.minimumf %6, %5 : vector<16x128xf32>
    %8 = arith.subf %3, %7 : vector<16x128xf32>
    %9 = arith.mulf %8, %8 : vector<16x128xf32>
    %c0_3 = arith.constant 0 : index
    %c0_4 = arith.constant 0 : index
    %10 = vector.load %arg3[%c0_3, %c0_4] : memref<8x128xf32, #tpu.memory_space<vmem>>, vector<8x128xf32>
    %11 = vector.shape_cast %9 : vector<16x128xf32> to vector<2x8x128xf32>
    %cst_5 = arith.constant dense<0.000000e+00> : vector<8x128xf32>
    %12 = vector.multi_reduction <add>, %11, %cst_5 [0] : vector<2x8x128xf32> to vector<8x128xf32>
    %13 = arith.addf %10, %12 : vector<8x128xf32>
    %c0_6 = arith.constant 0 : index
    %c0_7 = arith.constant 0 : index
    %14 = vector.load %arg3[%c0_6, %c0_7] : memref<8x128xf32, #tpu.memory_space<vmem>>, vector<8x128xf32>
    tpu.vector_store %arg3[%c0_6, %c0_7], %13 {strides = array<i32>} : memref<8x128xf32, #tpu.memory_space<vmem>>, vector<8x128xf32>,
    return
  }
  func.func @transform_0(%arg0: i32, %arg1: i32) -> (i32, i32) {
    %c1_i32 = arith.constant 1 : i32
    %0 = arith.muli %arg0, %c1_i32 : i32
    %1 = arith.addi %0, %arg1 : i32
    %c0_i32 = arith.constant 0 : i32
    %2 = arith.minsi %1, %c0_i32 : i32
    %c0_i32_0 = arith.constant 0 : i32
    %c0_i32_1 = arith.constant 0 : i32
    return %2, %c0_i32_0 : i32, i32
  }
  func.func @transform_1(%arg0: i32, %arg1: i32) -> (i32, i32) {
    %c0_i32 = arith.constant 0 : i32
    %c0_i32_0 = arith.constant 0 : i32
    return %arg0, %c0_i32 : i32, i32
  }
}

</mosaic_0001>

<llo_original>
// kernel: tpu_custom_call.1
$region0: #{tpu_custom_call.1}
  #allocation0 [shape = 'u32[]', space=smem, size = 0x4, offset = 0x4, fixed_abs, tag = 'smem constant byte address 0x4 - core index']
  #allocation1 [shape = 'u32[144,128]{1,0:T(1,128)}', space=vmem, size = 0x12000, scoped, tag = 'internal scratch']
  %s0 = inlined_call_operand.hbm [shape: f32[16,128], index: 0, kind: input, shape index: {}]
  %s1 = inlined_call_operand.hbm [shape: f32[8,128], index: 1, kind: output, shape index: {}]
  %s2 = sld [smem:[#allocation0]]
  $region22: #{tpu_custom_call.1} parent=0
    _
  %s4 = ssub.s32 1, %s2
  %s5 = scalar_select 0, %s4, %s2
  $region1: #{tpu_custom_call.1} parent=0
    #allocation2 [shape = 'u8[8192]{0}', space=vmem, size = 0x2000, scoped, tag = 'input window, operand 0, single buffered']
    #allocation3 [shape = 's32[1]{0}', space=sflag, size = 0x4, scoped, tag = 'scoped memory for tpu_custom_call.1']
    #allocation4 [shape = 's32[1]{0}', space=sflag, size = 0x4, scoped, tag = 'scoped memory for tpu_custom_call.1']
    #allocation5 [shape = 'u8[4096]{0}', space=vmem, size = 0x1000, scoped, tag = 'output window, operand 0, single buffered']
    %6 = vsyncpa [#allocation3], 0
    %7 = vsyncpa [#allocation4], 0
    // Predicated region
    $region2: #{tpu_custom_call.1} parent=1 // pred_check
      _
    $region3: #{tpu_custom_call.1} parent=1 // pred_check_branch
      %9 = sbr.rel (0) target = $region5
    $region4: #{tpu_custom_call.1} parent=1 // pred_region
      %s10 = sadd.s32 0, 0
      %p11 = scmp.lt.s32.totalorder %s10, 0
      %s12 = scalar_select %p11, %s10, 0
      %s13 = smul.u32 2, %s12
      %s15 = ssub.s32 256, 256
      %16 = vsyncadd [#allocation3], %s15
      %s17 = smul.addr %s13, 128
      %s18 = scalar_lea.hbm %s0, %s17
      %s19 = sshll.u32 [#allocation2], 4
      %s20 = int_to_ptr.vmem [resolvable:$true] %s19
      %25 = dma.hbm_to_vmem [thread:$0]  %s18, 256, %s20, [#allocation3], 128, 128, 8
    $region5: #{tpu_custom_call.1} parent=1 // pred_fallthru
      _
    // Predicated region
    $region6: #{tpu_custom_call.1} parent=1 // pred_check
      _
    $region7: #{tpu_custom_call.1} parent=1 // pred_check_branch
      %27 = sbr.rel (0) target = $region9
    $region8: #{tpu_custom_call.1} parent=1 // pred_region
      %28 = dma.done [#allocation3], 256
    $region9: #{tpu_custom_call.1} parent=1 // pred_fallthru
      _
    %s29 = sadd.s32 0, 0
    %p30 = scmp.lt.s32.totalorder %s29, 0
    %s31 = scalar_select %p30, %s29, 0
    %s32 = smul.u32 2, %s31
    %p33 = scmp.eq.s32.totalorder 0, 0
    // Predicated region
    $region10: #{tpu_custom_call.1} parent=1 // pred_check
      %p34 = pneg %p33
    $region11: #{tpu_custom_call.1} parent=1 // pred_check_branch
      %36 = sbr.rel (%p34) target = $region13
    $region12: #{tpu_custom_call.1} parent=1 // pred_region
      %37 = vst [vmem:[#allocation5] sm:$0xff] 0.0
    $region13: #{tpu_custom_call.1} parent=1 // pred_fallthru
      _
    %v38 = vld [vmem:[#allocation2] sm:$0xff]
    %v39 = vld [vmem:[#allocation2 + $0x8] sm:$0xff]
    %v40 = vmax.f32 %v38, 0.0
    %v41 = vmax.f32 %v39, 0.0
    %v42 = vmin.f32 %v40, 1.0
    %v43 = vmin.f32 %v41, 1.0
    %v44 = vsub.f32 %v38, %v42
    %v45 = vsub.f32 %v39, %v43
    %v46 = vmul.f32 %v44, %v44
    %v47 = vmul.f32 %v45, %v45
    %v48 = vld [vmem:[#allocation5] sm:$0xff]
    %v49 = vadd.f32 %v46, %v47
    %v50 = vadd.f32 %v48, %v49
    %51 = vst [vmem:[#allocation5] sm:$0xff] %v50
    // Predicated region
    $region14: #{tpu_custom_call.1} parent=1 // pred_check
      _
    $region15: #{tpu_custom_call.1} parent=1 // pred_check_branch
      %53 = sbr.rel (0) target = $region17
    $region16: #{tpu_custom_call.1} parent=1 // pred_region
      %s55 = ssub.s32 128, 128
      %56 = vsyncadd [#allocation4], %s55
      %s58 = sshll.u32 [#allocation5], 4
      %s59 = int_to_ptr.vmem [resolvable:$true] %s58
      %61 = dma.vmem_to_hbm [thread:$0]  %s59, 128, %s1, [#allocation4]
    $region17: #{tpu_custom_call.1} parent=1 // pred_fallthru
      _
    // Predicated region
    $region18: #{tpu_custom_call.1} parent=1 // pred_check
      _
    $region19: #{tpu_custom_call.1} parent=1 // pred_check_branch
      %63 = sbr.rel (0) target = $region21
    $region20: #{tpu_custom_call.1} parent=1 // pred_region
      %64 = dma.done [#allocation4], 128
    $region21: #{tpu_custom_call.1} parent=1 // pred_fallthru
      _
    %65 = vsyncpa [#allocation3], 1
    %66 = vsyncpa [#allocation4], 1

</llo_original>
